<compile_context>
chip_gen: v7x
topology: tpu7x:2x2x1
jax: 0.10.0
libtpu: 0.0.40
codegen_flags: <defaults>
</compile_context>

<pallas_src>
import functools

import jax
import jax.numpy as jnp
from jax import lax
from jax.experimental import pallas as pl
from jax.experimental.pallas import tpu as pltpu

MARGIN = 0.5
TEMPORAL_WEIGHT = 0.3  # TODO(synk): declared but unused in the reference forward; kept for parity.
PAIRWISE_EPS = 1e-6    # torch.nn.functional.pairwise_distance default eps
NEG_SENTINEL = 1e4     # per-element pad value for negatives; squared norm dominates, no f32 overflow
LANES = 128


def _round_up(x, m):
    return ((x + m - 1) // m) * m


def _pad_rows(x, rows, value=0.0):
    if x.shape[0] == rows:
        return x
    pad = jnp.full((rows - x.shape[0], x.shape[1]), value, x.dtype)
    return jnp.concatenate([x, pad], axis=0)


def _row_tiling(B, block_m):
    bm_min = _round_up(B, 8)
    tm = min(_round_up(block_m, 8), bm_min)
    if bm_min >= 16:
        # keep >= 2 row tiles so the "parallel" row axis can shard over v7x's 2 TCs
        tm = min(tm, _round_up((bm_min + 1) // 2, 8))
    bm = _round_up(B, tm)
    return tm, bm, bm // tm


def _row_valid_mask(i, tm, batch):
    # (tm, 1) bool: True for real (unpadded) anchor rows.  Built OUTSIDE any pl.when
    # so program_id / iota never land inside a lax.cond branch.
    row = i * tm + lax.broadcasted_iota(jnp.int32, (tm, 1), 0)
    return row < batch


def _lane_group_min(cand):
    """Element-wise (VPU) min over 128-lane groups: (tm, k*128) -> (tm, 128)."""
    tn = cand.shape[1]
    m = cand[:, 0:LANES]
    for g in range(1, tn // LANES):
        m = jnp.minimum(m, cand[:, g * LANES:(g + 1) * LANES])
    return m


def _finalize_loss(a, p_ref, row_min, margin, valid):
    """Per-row hinge loss sum for one anchor row tile."""
    a32 = a.astype(jnp.float32)
    p32 = p_ref[...].astype(jnp.float32)
    a_sq = jnp.sum(a32 * a32, axis=-1, keepdims=True)              # (tm, 1)
    # min-before-sqrt: sqrt / max(.,0) are monotone, so this equals min_j ||a_i - n_j||
    neg_dist = jnp.sqrt(jnp.maximum(row_min + a_sq, 0.0))          # (tm, 1)
    dp = a32 - p32 + PAIRWISE_EPS                                   # torch eps convention
    pos_dist = jnp.sqrt(jnp.sum(dp * dp, axis=-1, keepdims=True))  # (tm, 1)
    loss = jnp.maximum(pos_dist - neg_dist + margin, 0.0)
    if valid is not None:
        loss = jnp.where(valid, loss, 0.0)
    return jnp.sum(loss)


def _hard_neg_resident_kernel(nsq_ref, a_ref, p_ref, n_ref, o_ref, *, margin, batch):
    """Grid (row_tiles,): whole (padded) negative matrix is VMEM-resident."""
    i = pl.program_id(0)
    tm = a_ref.shape[0]
    valid = _row_valid_mask(i, tm, batch) if batch % tm != 0 else None

    a = a_ref[...]                                   # (tm, D) native dtype -> MXU
    n = n_ref[...]                                   # (bn, D) resident negatives
    a_m2 = a * jnp.array(-2.0, a.dtype)              # fold -2 into the MXU operand (exact)
    cross = lax.dot_general(a_m2, n, (((1,), (1,)), ((), ())),
                            preferred_element_type=jnp.float32)     # (tm, bn) = -2<a, n>
    cand = cross + nsq_ref[...]                      # + ||n_j||^2 (precomputed in wrapper)
    row_min = jnp.min(_lane_group_min(cand), axis=1, keepdims=True)  # one XLU reduce / tile
    o_ref[...] = jnp.broadcast_to(
        _finalize_loss(a, p_ref, row_min, margin, valid), o_ref.shape)


def _hard_neg_tiled_kernel(nsq_ref, a_ref, p_ref, n_ref, o_ref, min_ref, *, margin, batch):
    """Grid (row_tiles, col_tiles); col axis is the hard-negative min reduction."""
    i = pl.program_id(0)
    j = pl.program_id(1)
    nj = pl.num_programs(1)
    tm = a_ref.shape[0]
    valid = _row_valid_mask(i, tm, batch) if batch % tm != 0 else None

    a = a_ref[...]                                   # (tm, D)
    n = n_ref[...]                                   # (tn, D)
    a_m2 = a * jnp.array(-2.0, a.dtype)
    cross = lax.dot_general(a_m2, n, (((1,), (1,)), ((), ())),
                            preferred_element_type=jnp.float32)     # (tm, tn)
    cand = cross + nsq_ref[...]                      # sentinel-padded cols never win the min
    m = _lane_group_min(cand)                        # (tm, 128) element-wise (VPU)

    @pl.when(j == 0)
    def _init():
        min_ref[...] = jnp.full(min_ref.shape, jnp.inf, min_ref.dtype)

    min_ref[...] = jnp.minimum(min_ref[...], m)      # lane-dense running min (VPU)

    @pl.when(j == nj - 1)
    def _finalize():
        row_min = jnp.min(min_ref[...], axis=1, keepdims=True)      # gm XLU reduces total
        o_ref[...] = jnp.broadcast_to(
            _finalize_loss(a, p_ref, row_min, margin, valid), o_ref.shape)


def _triplet_kernel(a_ref, p_ref, n_ref, o_ref, *, margin, batch):
    """use_hard_negatives=False path: plain per-row triplet hinge, grid over rows."""
    i = pl.program_id(0)
    tm = a_ref.shape[0]
    valid = _row_valid_mask(i, tm, batch) if batch % tm != 0 else None

    a = a_ref[...].astype(jnp.float32)
    p = p_ref[...].astype(jnp.float32)
    n = n_ref[...].astype(jnp.float32)
    dp = a - p + PAIRWISE_EPS
    dn = a - n + PAIRWISE_EPS
    pos_dist = jnp.sqrt(jnp.sum(dp * dp, axis=-1, keepdims=True))
    neg_dist = jnp.sqrt(jnp.sum(dn * dn, axis=-1, keepdims=True))
    loss = jnp.maximum(pos_dist - neg_dist + margin, 0.0)
    if valid is not None:
        loss = jnp.where(valid, loss, 0.0)
    o_ref[...] = jnp.broadcast_to(jnp.sum(loss), o_ref.shape)


def _compiler_params(sem, vmem_bytes=32 * 1024 * 1024):
    # 32 MiB scoped VMEM is safe on v5e/v6e/v7x; v6e (128 MiB physical) users can
    # raise this together with block_m to cut HBM re-streaming of the negatives.
    return pltpu.CompilerParams(dimension_semantics=sem, vmem_limit_bytes=vmem_bytes)


def temporal_quadruplet_loss(anchor, positive, negative, use_hard_negatives=True,
                             margin=MARGIN, block_m=256, block_n=256,
                             max_resident_negative_bytes=8 * 1024 * 1024):
    """Pallas port of TemporalQuadrupletLoss.forward -> scalar mean loss."""
    B, D = anchor.shape
    # NOTE: D < 128 (as in the demo) under-fills lanes/MXU; real embedding dims
    # should be a multiple of 128.

    tm, bm, gm = _row_tiling(B, block_m)
    a = _pad_rows(anchor, bm)
    p = _pad_rows(positive, bm)

    if use_hard_negatives:
        tn = min(_round_up(block_n, LANES), _round_up(B, LANES))
        bn = _round_up(B, tn)
        # Sentinel padding: padded negatives have a huge squared norm, so they can
        # never win the min and the kernel needs no per-step column mask.
        n = _pad_rows(negative, bn, value=NEG_SENTINEL)
        n32 = n.astype(jnp.float32)
        n_sq = jnp.sum(n32 * n32, axis=1)[None, :]          # (1, bn) f32, computed once

        neg_bytes = bn * D * n.dtype.itemsize
        cand_bytes = tm * bn * 4                            # (tm, bn) f32 intermediate
        resident = (neg_bytes <= max_resident_negative_bytes
                    and cand_bytes <= 8 * 1024 * 1024)

        if resident:
            kernel = functools.partial(_hard_neg_resident_kernel, margin=margin, batch=B)
            partial_sums = pl.pallas_call(
                kernel,
                out_shape=jax.ShapeDtypeStruct((gm, 1, LANES), jnp.float32),
                grid=(gm,),
                in_specs=[
                    pl.BlockSpec((1, bn), lambda i: (0, 0)),    # ||n||^2 (resident)
                    pl.BlockSpec((tm, D), lambda i: (i, 0)),    # anchor rows
                    pl.BlockSpec((tm, D), lambda i: (i, 0)),    # positive rows
                    pl.BlockSpec((bn, D), lambda i: (0, 0)),    # negatives, fetched once
                ],
                out_specs=pl.BlockSpec((1, 1, LANES), lambda i: (i, 0, 0)),
                compiler_params=_compiler_params(("parallel",)),
            )(n_sq, a, p, n)
        else:
            gn = bn // tn
            kernel = functools.partial(_hard_neg_tiled_kernel, margin=margin, batch=B)
            partial_sums = pl.pallas_call(
                kernel,
                out_shape=jax.ShapeDtypeStruct((gm, 1, LANES), jnp.float32),
                grid=(gm, gn),
                in_specs=[
                    pl.BlockSpec((1, tn), lambda i, j: (0, j)),   # ||n||^2 tile
                    pl.BlockSpec((tm, D), lambda i, j: (i, 0)),   # anchor rows
                    pl.BlockSpec((tm, D), lambda i, j: (i, 0)),   # positive rows
                    pl.BlockSpec((tn, D), lambda i, j: (j, 0)),   # negative cols (reduction)
                ],
                out_specs=pl.BlockSpec((1, 1, LANES), lambda i, j: (i, 0, 0)),
                scratch_shapes=[pltpu.VMEM((tm, LANES), jnp.float32)],  # lane-dense running min
                compiler_params=_compiler_params(("parallel", "arbitrary")),
            )(n_sq, a, p, n)
    else:
        n = _pad_rows(negative, bm)
        kernel = functools.partial(_triplet_kernel, margin=margin, batch=B)
        partial_sums = pl.pallas_call(
            kernel,
            out_shape=jax.ShapeDtypeStruct((gm, 1, LANES), jnp.float32),
            grid=(gm,),
            in_specs=[pl.BlockSpec((tm, D), lambda i: (i, 0))] * 3,
            out_specs=pl.BlockSpec((1, 1, LANES), lambda i: (i, 0, 0)),
            compiler_params=_compiler_params(("parallel",)),
        )(a, p, n)

    # every lane of a row-tile's output holds the same partial sum -> read lane 0
    return jnp.sum(partial_sums[:, 0, 0]) / B


def _reference_loss(anchor, positive, negative, use_hard_negatives=True, margin=MARGIN):
    a = anchor.astype(jnp.float32)
    p = positive.astype(jnp.float32)
    n = negative.astype(jnp.float32)
    pos = jnp.sqrt(jnp.sum((a - p + PAIRWISE_EPS) ** 2, axis=-1))
    if use_hard_negatives:
        d = jnp.sqrt(jnp.sum((a[:, None, :] - n[None, :, :]) ** 2, axis=-1))
        neg = jnp.min(d, axis=1)
    else:
        neg = jnp.sqrt(jnp.sum((a - n + PAIRWISE_EPS) ** 2, axis=-1))
    return jnp.mean(jnp.maximum(pos - neg + margin, 0.0))


if __name__ == "__main__":
    key = jax.random.PRNGKey(0)
    # (B, D, block_m, block_n, max_resident_negative_bytes)
    configs = [
        (8,   32, 256, 256, 8 * 1024 * 1024),  # single tile, resident negatives
        (10,  32, 256, 256, 8 * 1024 * 1024),  # padded rows, gm=2, resident
        (24,  32,   8, 128, 8 * 1024 * 1024),  # multiple row tiles, resident
        (24,  32,   8, 128, 0),                # forced tiled path, single column tile
        (200, 32,  64, 128, 0),                # forced tiled path, gm=4 x gn=2 running min
    ]
    for (B, D, bm_blk, bn_blk, res_bytes) in configs:
        key, k_a, k_p, k_n = jax.random.split(key, 4)
        anchor = jax.random.normal(k_a, (B, D), dtype=jnp.float32)
        positive = jax.random.normal(k_p, (B, D), dtype=jnp.float32)
        negative = jax.random.normal(k_n, (B, D), dtype=jnp.float32)
        for hard in (True, False):
            out = temporal_quadruplet_loss(
                anchor, positive, negative, use_hard_negatives=hard,
                block_m=bm_blk, block_n=bn_blk,
                max_resident_negative_bytes=res_bytes)
            out = jax.block_until_ready(out)
            ref = _reference_loss(anchor, positive, negative, hard)
            assert jnp.allclose(out, ref, atol=1e-4), (
                B, hard, res_bytes, float(out), float(ref))
    print("KERNEL_OK")
</pallas_src>

<mosaic_0001>
module attributes {stable_mosaic.version = 11 : i64} {
  func.func @_hard_neg_resident_kernel(%arg0: i32, %arg1: memref<1x128xf32, #tpu.memory_space<vmem>>, %arg2: memref<8x32xf32, #tpu.memory_space<vmem>>, %arg3: memref<8x32xf32, #tpu.memory_space<vmem>>, %arg4: memref<128x32xf32, #tpu.memory_space<vmem>>, %arg5: memref<1x1x128xf32, #tpu.memory_space<vmem>>) attributes {dimension_semantics = [#tpu.dimension_semantics<parallel>], iteration_bounds = array<i64: 1>, scalar_prefetch = 0 : i64, scratch_operands = 0 : i64, tpu.core_type = #tpu.core_type<tc>, window_params = [{pipeline_mode = #tpu.pipeline_mode<synchronous>, transform_indices = @transform_0, window_bounds = array<i64: 1, 128>}, {transform_indices = @transform_1, window_bounds = array<i64: 8, 32>}, {transform_indices = @transform_2, window_bounds = array<i64: 8, 32>}, {pipeline_mode = #tpu.pipeline_mode<synchronous>, transform_indices = @transform_3, window_bounds = array<i64: 128, 32>}, {transform_indices = @transform_4, window_bounds = array<i64: 1, 1, 128>}]} {
    %c0 = arith.constant 0 : index
    %c0_0 = arith.constant 0 : index
    %0 = vector.load %arg2[%c0, %c0_0] : memref<8x32xf32, #tpu.memory_space<vmem>>, vector<8x32xf32>
    %c0_1 = arith.constant 0 : index
    %c0_2 = arith.constant 0 : index
    %1 = vector.load %arg4[%c0_1, %c0_2] : memref<128x32xf32, #tpu.memory_space<vmem>>, vector<128x32xf32>
    %cst = arith.constant -2.000000e+00 : f32
    %2 = vector.broadcast %cst : f32 to vector<8x32xf32>
    %3 = arith.mulf %0, %2 : vector<8x32xf32>
    %cst_3 = arith.constant dense<0.000000e+00> : vector<8x128xf32>
    %4 = tpu.matmul %3, %1, %cst_3 {dimension_numbers = #tpu.dot_dimension_numbers<[1], [1], [0], [0], [0, 0, 1, 0], [], []>} : vector<8x32xf32>, vector<128x32xf32>, vector<8x128xf32> -> vector<8x128xf32>
    %c0_4 = arith.constant 0 : index
    %c0_5 = arith.constant 0 : index
    %5 = vector.load %arg1[%c0_4, %c0_5] : memref<1x128xf32, #tpu.memory_space<vmem>>, vector<1x128xf32>
    %6 = vector.broadcast %5 : vector<1x128xf32> to vector<8x128xf32>
    %7 = arith.addf %4, %6 : vector<8x128xf32>
    %cst_6 = arith.constant dense<0x7F800000> : vector<8xf32>
    %8 = vector.multi_reduction <minimumf>, %7, %cst_6 [1] : vector<8x128xf32> to vector<8xf32>
    %9 = vector.shape_cast %8 : vector<8xf32> to vector<8x1xf32>
    %c0_7 = arith.constant 0 : index
    %c0_8 = arith.constant 0 : index
    %10 = vector.load %arg3[%c0_7, %c0_8] : memref<8x32xf32, #tpu.memory_space<vmem>>, vector<8x32xf32>
    %11 = arith.mulf %0, %0 : vector<8x32xf32>
    %cst_9 = arith.constant dense<0.000000e+00> : vector<8xf32>
    %12 = vector.multi_reduction <add>, %11, %cst_9 [1] : vector<8x32xf32> to vector<8xf32>
    %13 = vector.shape_cast %12 : vector<8xf32> to vector<8x1xf32>
    %14 = arith.addf %9, %13 : vector<8x1xf32>
    %cst_10 = arith.constant 0.000000e+00 : f32
    %15 = vector.broadcast %cst_10 : f32 to vector<8x1xf32>
    %16 = arith.maximumf %14, %15 : vector<8x1xf32>
    %17 = math.sqrt %16 : vector<8x1xf32>
    %18 = arith.subf %0, %10 : vector<8x32xf32>
    %cst_11 = arith.constant 9.99999997E-7 : f32
    %19 = vector.broadcast %cst_11 : f32 to vector<8x32xf32>
    %20 = arith.addf %18, %19 : vector<8x32xf32>
    %21 = arith.mulf %20, %20 : vector<8x32xf32>
    %cst_12 = arith.constant dense<0.000000e+00> : vector<8xf32>
    %22 = vector.multi_reduction <add>, %21, %cst_12 [1] : vector<8x32xf32> to vector<8xf32>
    %23 = vector.shape_cast %22 : vector<8xf32> to vector<8x1xf32>
    %24 = math.sqrt %23 : vector<8x1xf32>
    %25 = arith.subf %24, %17 : vector<8x1xf32>
    %cst_13 = arith.constant 5.000000e-01 : f32
    %26 = vector.broadcast %cst_13 : f32 to vector<8x1xf32>
    %27 = arith.addf %25, %26 : vector<8x1xf32>
    %cst_14 = arith.constant 0.000000e+00 : f32
    %28 = vector.broadcast %cst_14 : f32 to vector<8x1xf32>
    %29 = arith.maximumf %27, %28 : vector<8x1xf32>
    %30 = vector.shape_cast %29 : vector<8x1xf32> to vector<1x8x1xf32>
    %cst_15 = arith.constant dense<0.000000e+00> : vector<1xf32>
    %31 = vector.multi_reduction <add>, %30, %cst_15 [1, 2] : vector<1x8x1xf32> to vector<1xf32>
    %32 = vector.shape_cast %31 : vector<1xf32> to vector<1x1x1xf32>
    %33 = vector.extract %32[0, 0, 0] : f32 from vector<1x1x1xf32>
    %34 = vector.broadcast %33 : f32 to vector<1x1x128xf32>
    %c0_16 = arith.constant 0 : index
    %c0_17 = arith.constant 0 : index
    %c0_18 = arith.constant 0 : index
    %35 = vector.load %arg5[%c0_16, %c0_17, %c0_18] : memref<1x1x128xf32, #tpu.memory_space<vmem>>, vector<1x1x128xf32>
    tpu.vector_store %arg5[%c0_16, %c0_17, %c0_18], %34 {strides = array<i32>} : memref<1x1x128xf32, #tpu.memory_space<vmem>>, vector<1x1x128xf32>,
    return
  }
  func.func @transform_0(%arg0: i32) -> (i32, i32) {
    %c0_i32 = arith.constant 0 : i32
    %c0_i32_0 = arith.constant 0 : i32
    %c0_i32_1 = arith.constant 0 : i32
    return %c0_i32, %c0_i32_0 : i32, i32
  }
  func.func @transform_1(%arg0: i32) -> (i32, i32) {
    %c0_i32 = arith.constant 0 : i32
    %c0_i32_0 = arith.constant 0 : i32
    return %arg0, %c0_i32 : i32, i32
  }
  func.func @transform_2(%arg0: i32) -> (i32, i32) {
    %c0_i32 = arith.constant 0 : i32
    %c0_i32_0 = arith.constant 0 : i32
    return %arg0, %c0_i32 : i32, i32
  }
  func.func @transform_3(%arg0: i32) -> (i32, i32) {
    %c0_i32 = arith.constant 0 : i32
    %c0_i32_0 = arith.constant 0 : i32
    %c0_i32_1 = arith.constant 0 : i32
    return %c0_i32, %c0_i32_0 : i32, i32
  }
  func.func @transform_4(%arg0: i32) -> (i32, i32, i32) {
    %c0_i32 = arith.constant 0 : i32
    %c0_i32_0 = arith.constant 0 : i32
    %c0_i32_1 = arith.constant 0 : i32
    return %arg0, %c0_i32, %c0_i32_0 : i32, i32, i32
  }
}

</mosaic_0001>

<llo_original>
// kernel: tpu_custom_call.1
$region0: #{tpu_custom_call.1}
  #allocation0 [shape = 'u32[]', space=smem, size = 0x4, offset = 0x4, fixed_abs, tag = 'smem constant byte address 0x4 - core index']
  #allocation1 [shape = 'u32[144,128]{1,0:T(1,128)}', space=vmem, size = 0x12000, scoped, tag = 'internal scratch']
  %s0 = inlined_call_operand.vmem [shape: f32[1,128], index: 0, kind: input, shape index: {}]
  %s1 = inlined_call_operand.vmem [shape: f32[8,32], index: 1, kind: input, shape index: {}]
  %s2 = inlined_call_operand.vmem [shape: f32[8,32], index: 2, kind: input, shape index: {}]
  %s3 = inlined_call_operand.vmem [shape: f32[128,32], index: 3, kind: input, shape index: {}]
  %s4 = inlined_call_operand.hbm [shape: f32[1,1,128], index: 4, kind: output, shape index: {}]
  %s5 = sld [smem:[#allocation0]]
  $region26: #{tpu_custom_call.1} parent=0
    _
  %s7 = ssub.s32 1, %s5
  %s8 = scalar_select 0, %s7, %s5
  $region1: #{tpu_custom_call.1} parent=0
    #allocation2 [shape = 'u8[512]{0}', space=vmem, size = 0x400, scoped, tag = 'output window, operand 0, single buffered']
    #allocation3 [shape = 's32[1]{0}', space=sflag, size = 0x4, scoped, tag = 'scoped memory for tpu_custom_call.1']
    %9 = vsyncpa [#allocation3], 0
    // Predicated region
    $region2: #{tpu_custom_call.1} parent=1 // pred_check
      _
    $region3: #{tpu_custom_call.1} parent=1 // pred_check_branch
      %11 = sbr.rel (0) target = $region5
    $region4: #{tpu_custom_call.1} parent=1 // pred_region
      _
    $region5: #{tpu_custom_call.1} parent=1 // pred_fallthru
      _
    // Predicated region
    $region6: #{tpu_custom_call.1} parent=1 // pred_check
      _
    $region7: #{tpu_custom_call.1} parent=1 // pred_check_branch
      %13 = sbr.rel (0) target = $region9
    $region8: #{tpu_custom_call.1} parent=1 // pred_region
      _
    $region9: #{tpu_custom_call.1} parent=1 // pred_fallthru
      _
    // Predicated region
    $region10: #{tpu_custom_call.1} parent=1 // pred_check
      _
    $region11: #{tpu_custom_call.1} parent=1 // pred_check_branch
      %15 = sbr.rel (0) target = $region13
    $region12: #{tpu_custom_call.1} parent=1 // pred_region
      _
    $region13: #{tpu_custom_call.1} parent=1 // pred_fallthru
      _
    // Predicated region
    $region14: #{tpu_custom_call.1} parent=1 // pred_check
      _
    $region15: #{tpu_custom_call.1} parent=1 // pred_check_branch
      %17 = sbr.rel (0) target = $region17
    $region16: #{tpu_custom_call.1} parent=1 // pred_region
      _
    $region17: #{tpu_custom_call.1} parent=1 // pred_fallthru
      _
    %v18 = vld [vmem:[%s1] sm:$0xff]
    %v19 = vld [vmem:[%s3] sm:$0xff]
    %v20 = vld [vmem:[%s3 + $0x8] sm:$0xff]
    %v21 = vld [vmem:[%s3 + $0x10] sm:$0xff]
    %v22 = vld [vmem:[%s3 + $0x18] sm:$0xff]
    %v23 = vld [vmem:[%s3 + $0x20] sm:$0xff]
    %v24 = vld [vmem:[%s3 + $0x28] sm:$0xff]
    %v25 = vld [vmem:[%s3 + $0x30] sm:$0xff]
    %v26 = vld [vmem:[%s3 + $0x38] sm:$0xff]
    %v27 = vld [vmem:[%s3 + $0x40] sm:$0xff]
    %v28 = vld [vmem:[%s3 + $0x48] sm:$0xff]
    %v29 = vld [vmem:[%s3 + $0x50] sm:$0xff]
    %v30 = vld [vmem:[%s3 + $0x58] sm:$0xff]
    %v31 = vld [vmem:[%s3 + $0x60] sm:$0xff]
    %v32 = vld [vmem:[%s3 + $0x68] sm:$0xff]
    %v33 = vld [vmem:[%s3 + $0x70] sm:$0xff]
    %v34 = vld [vmem:[%s3 + $0x78] sm:$0xff]
    %v35 = vmul.f32 %v18, -2.0
    %v36 = vld [vmem:[%s0] sm:$0x1]
    %v38 = vlaneseq
    %v39 = vshrl.u32 %v38, 7
    %v40 = vsub.s32 0, %v39
    %v41 = vrot.slane %v36, %v40
    %vm43 = vcmask 261120
    %v45 = vsel %vm43, %v35, 0
    %v48 = vsel %vm43, %v19, 0
    %v51 = vsel %vm43, %v20, 0
    %v54 = vsel %vm43, %v21, 0
    %v57 = vsel %vm43, %v22, 0
    %v60 = vsel %vm43, %v23, 0
    %v63 = vsel %vm43, %v24, 0
    %v66 = vsel %vm43, %v25, 0
    %v69 = vsel %vm43, %v26, 0
    %v72 = vsel %vm43, %v27, 0
    %v75 = vsel %vm43, %v28, 0
    %v78 = vsel %vm43, %v29, 0
    %v81 = vsel %vm43, %v30, 0
    %v84 = vsel %vm43, %v31, 0
    %v87 = vsel %vm43, %v32, 0
    %v90 = vsel %vm43, %v33, 0
    %v93 = vsel %vm43, %v34, 0
    %95 = vmatprep.subr.mxu0 0.0
    %96 = vmatpush1.xpose.msra.mxu0 %v48
    %97 = vmatprep.subr.mxu0 0.0
    %98 = vmatpush1.xpose.msra.mxu0 %v51
    %99 = vmatprep.subr.mxu0 0.0
    %100 = vmatpush1.xpose.msra.mxu0 %v54
    %101 = vmatprep.subr.mxu0 0.0
    %102 = vmatpush1.xpose.msra.mxu0 %v57
    %103 = vmatprep.subr.mxu0 0.0
    %104 = vmatpush1.xpose.msra.mxu0 %v60
    %105 = vmatprep.subr.mxu0 0.0
    %106 = vmatpush1.xpose.msra.mxu0 %v63
    %107 = vmatprep.subr.mxu0 0.0
    %108 = vmatpush1.xpose.msra.mxu0 %v66
    %109 = vmatprep.subr.mxu0 0.0
    %110 = vmatpush1.xpose.msra.mxu0 %v69
    %111 = vmatprep.subr.mxu0 0.0
    %112 = vmatpush1.xpose.msra.mxu0 %v72
    %113 = vmatprep.subr.mxu0 0.0
    %114 = vmatpush1.xpose.msra.mxu0 %v75
    %115 = vmatprep.subr.mxu0 0.0
    %116 = vmatpush1.xpose.msra.mxu0 %v78
    %117 = vmatprep.subr.mxu0 0.0
    %118 = vmatpush1.xpose.msra.mxu0 %v81
    %119 = vmatprep.subr.mxu0 0.0
    %120 = vmatpush1.xpose.msra.mxu0 %v84
    %121 = vmatprep.subr.mxu0 0.0
    %122 = vmatpush1.xpose.msra.mxu0 %v87
    %123 = vmatprep.subr.mxu0 0.0
    %124 = vmatpush1.xpose.msra.mxu0 %v90
    %125 = vmatprep.subr.mxu0 0.0
    %126 = vmatpush1.xpose.msra.mxu0 %v93
    %127 = vmatprep.subr.mxu0 0.0
    %128 = vmatpush1.xpose.msra.mxu0 0.0
    %129 = vmatprep.subr.mxu0 0.0
    %130 = vmatpush1.xpose.msra.mxu0 0.0
    %131 = vmatprep.subr.mxu0 0.0
    %132 = vmatpush1.xpose.msra.mxu0 0.0
    %133 = vmatprep.subr.mxu0 0.0
    %134 = vmatpush1.xpose.msra.mxu0 0.0
    %135 = vmatprep.subr.mxu0 0.0
    %136 = vmatpush1.xpose.msra.mxu0 0.0
    %137 = vmatprep.subr.mxu0 0.0
    %138 = vmatpush1.xpose.msra.mxu0 0.0
    %139 = vmatprep.subr.mxu0 0.0
    %140 = vmatpush1.xpose.msra.mxu0 0.0
    %141 = vmatprep.subr.mxu0 0.0
    %142 = vmatpush1.xpose.msra.mxu0 0.0
    %143 = vmatprep.subr.mxu0 0.0
    %144 = vmatpush1.xpose.msra.mxu0 0.0
    %145 = vmatprep.subr.mxu0 0.0
    %146 = vmatpush1.xpose.msra.mxu0 0.0
    %147 = vmatprep.subr.mxu0 0.0
    %148 = vmatpush1.xpose.msra.mxu0 0.0
    %149 = vmatprep.subr.mxu0 0.0
    %150 = vmatpush1.xpose.msra.mxu0 0.0
    %151 = vmatprep.subr.mxu0 0.0
    %152 = vmatpush1.xpose.msra.mxu0 0.0
    %153 = vmatprep.subr.mxu0 0.0
    %154 = vmatpush1.xpose.msra.mxu0 0.0
    %155 = vmatprep.subr.mxu0 0.0
    %156 = vmatpush1.xpose.msra.mxu0 0.0
    %157 = vmatprep.subr.mxu0 0.0
    %158 = vmatpush1.xpose.msra.mxu0 0.0
    %159 = vmatprep.mubr.f32.mxu0 0.0
    %160 = vmatmul.mubr.f32.gmra.mrb[0].mxu0 %v45
    %v161 = vpop.f32.mrb[0].mxu0
    %v162 = vadd.f32 %v41, %v161
    %v163 = vpop.f32.mrb[0].mxu0
    %164 = vdwg.mxu0
    %165 = vmin.xlane.f32.xlu0 %v162
    %v166 = vpop.xlane.xlu0 %165
    %v167 = vld [vmem:[%s2] sm:$0xff]
    %v168 = vmul.f32 %v18, %v18
    %v169 = vsel %vm43, %v168, 0.0
    %170 = vadd.xlane.f32.xlu0 %v169
    %v171 = vpop.xlane.xlu0 %170
    %v172 = vadd.f32 %v166, %v171
    %v173 = vmax.f32 %v172, 0.0
    %v174 = vrsqrt.pop %v173
    %v175 = vmul.f32 %v173, %v174
    %vm176 = vcmp.eq.f32.partialorder %v173, inf
    %v177 = vsel %vm176, %v173, %v175
    %vm178 = vcmp.eq.f32.partialorder %v173, 0.0
    %v179 = vand.u32 %v173, 2147483648
    %v180 = vsel %vm178, %v179, %v177
    %v181 = vsub.f32 %v18, %v167
    %v182 = vadd.f32 %v181, 1e-06
    %v183 = vmul.f32 %v182, %v182
    %v184 = vsel %vm43, %v183, 0.0
    %185 = vadd.xlane.f32.xlu0 %v184
    %v186 = vpop.xlane.xlu0 %185
    %v187 = vrsqrt.pop %v186
    %v188 = vmul.f32 %v186, %v187
    %vm189 = vcmp.eq.f32.partialorder %v186, inf
    %v190 = vsel %vm189, %v186, %v188
    %vm191 = vcmp.eq.f32.partialorder %v186, 0.0
    %v192 = vand.u32 %v186, 2147483648
    %v193 = vsel %vm191, %v192, %v190
    %v194 = vsub.f32 %v193, %v180
    %v195 = vadd.f32 %v194, 0.5
    %v196 = vmax.f32 %v195, 0.0
    %vm197 = vcmask 7168
    %v198 = vsel %vm197, %v196, 0.0
    %199 = vadd.xlane.f32.xlu0 %v198
    %v200 = vpop.xlane.xlu0 %199
    %v201 = vrot.slane %v200, 4
    %v202 = vadd.f32 %v200, %v201
    %v203 = vrot.slane %v202, 2
    %v204 = vadd.f32 %v202, %v203
    %v205 = vrot.slane %v204, 1
    %v206 = vadd.f32 %v204, %v205
    %s207 = vtos %v206
    %v208 = vstv %s207
    %209 = vst [vmem:[#allocation2] sm:$0x1] %v208
    // Predicated region
    $region18: #{tpu_custom_call.1} parent=1 // pred_check
      _
    $region19: #{tpu_custom_call.1} parent=1 // pred_check_branch
      %211 = sbr.rel (0) target = $region21
    $region20: #{tpu_custom_call.1} parent=1 // pred_region
      %s213 = ssub.s32 16, 16
      %214 = vsyncadd [#allocation3], %s213
      %s216 = sshll.u32 [#allocation2], 4
      %s217 = int_to_ptr.vmem [resolvable:$true] %s216
      %219 = dma.vmem_to_hbm [thread:$0]  %s217, 16, %s4, [#allocation3]
    $region21: #{tpu_custom_call.1} parent=1 // pred_fallthru
      _
    // Predicated region
    $region22: #{tpu_custom_call.1} parent=1 // pred_check
      _
    $region23: #{tpu_custom_call.1} parent=1 // pred_check_branch
      %221 = sbr.rel (0) target = $region25
    $region24: #{tpu_custom_call.1} parent=1 // pred_region
      %222 = dma.done [#allocation3], 16
    $region25: #{tpu_custom_call.1} parent=1 // pred_fallthru
      _
    %223 = vsyncpa [#allocation3], 1

</llo_original>
